<compile_context>
chip_gen: v5e
topology: v5e:2x2
jax: 0.10.0
libtpu: 0.0.40
codegen_flags: <defaults>
</compile_context>

<pallas_src>
import math
from functools import partial

import jax
import jax.numpy as jnp
from jax import lax
from jax.experimental import pallas as pl
from jax.experimental.pallas import tpu as pltpu


# --------------------------------------------------------------------------
# Kernel 1: GroupNorm + fused QKV projection (one grid step per batch element)
# --------------------------------------------------------------------------
def norm_qkv_kernel(x_ref, gamma_ref, beta_ref, gmap_ref, w_ref, b_ref,
                    qkv_ref, *, eps, inv_n):
    x = x_ref[...]                                     # (S, C) f32
    gmap = gmap_ref[...]                               # (C, G) one-hot, f32

    # --- GroupNorm statistics (two-pass form for numerical robustness) ---
    s1 = jnp.sum(x, axis=0, keepdims=True)             # (1, C)
    mean_g = jnp.dot(s1, gmap, preferred_element_type=jnp.float32) * inv_n   # (1, G)
    # scatter group stats back to channels without transposing gmap
    mean_c = lax.dot_general(mean_g, gmap, (((1,), (1,)), ((), ())),
                             preferred_element_type=jnp.float32)             # (1, C)
    d = x - mean_c
    s2 = jnp.sum(d * d, axis=0, keepdims=True)          # (1, C)
    var_g = jnp.dot(s2, gmap, preferred_element_type=jnp.float32) * inv_n
    var_c = lax.dot_general(var_g, gmap, (((1,), (1,)), ((), ())),
                            preferred_element_type=jnp.float32)

    # folded affine: h = (x - mean) * (rsqrt(var+eps) * gamma) + beta
    a = lax.rsqrt(var_c + eps) * gamma_ref[...]          # (1, C)
    h = d * a + beta_ref[...]                            # (S, C)

    # --- fused QKV projection on the MXU (bf16 inputs, f32 accumulate) ---
    # weight already transposed to (C, 3C); q-scale folded into weight/bias.
    qkv = jnp.dot(h.astype(jnp.bfloat16), w_ref[...],
                  preferred_element_type=jnp.float32) + b_ref[...]           # (S, 3C)
    qkv_ref[...] = qkv.astype(jnp.bfloat16)              # single lane-dense store


# --------------------------------------------------------------------------
# Kernel 2: flash-style attention + output projection + residual
# grid = (B, n_q_tiles, n_kv_tiles); KV axis innermost (accumulator pattern)
# --------------------------------------------------------------------------
def flash_attn_proj_kernel(x_ref, q_ref, k_ref, v_ref, wp_ref, bp_ref, o_ref,
                           m_ref, l_ref, acc_ref, *, num_heads):
    j = pl.program_id(2)

    @pl.when(j == 0)
    def _init():
        m_ref[...] = jnp.full(m_ref.shape, -1e30, jnp.float32)
        l_ref[...] = jnp.zeros(l_ref.shape, jnp.float32)
        acc_ref[...] = jnp.zeros(acc_ref.shape, jnp.float32)

    q = q_ref[...]                                     # (TQ, C) bf16, pre-scaled
    k = k_ref[...]                                     # (TK, C) bf16
    v = v_ref[...]                                     # (TK, C) bf16
    c = q.shape[-1]
    ch = c // num_heads

    for h in range(num_heads):                          # static loop (num_heads small)
        c0, c1 = h * ch, (h + 1) * ch
        # scores: contract the channel axes directly (no transposed copy of k)
        s = lax.dot_general(q[:, c0:c1], k[:, c0:c1], (((1,), (1,)), ((), ())),
                            preferred_element_type=jnp.float32)       # (TQ, TK) f32

        m_prev = m_ref[:, h:h + 1]
        m_new = jnp.maximum(m_prev, jnp.max(s, axis=-1, keepdims=True))
        alpha = jnp.exp(m_prev - m_new)
        p = jnp.exp(s - m_new)
        l_ref[:, h:h + 1] = alpha * l_ref[:, h:h + 1] + jnp.sum(p, axis=-1, keepdims=True)
        acc_ref[:, c0:c1] = alpha * acc_ref[:, c0:c1] + jnp.dot(
            p.astype(jnp.bfloat16), v[:, c0:c1], preferred_element_type=jnp.float32)
        m_ref[:, h:h + 1] = m_new

    @pl.when(j == pl.num_programs(2) - 1)
    def _finalize():
        for h in range(num_heads):
            c0, c1 = h * ch, (h + 1) * ch
            inv_l = pl.reciprocal(l_ref[:, h:h + 1], approx=True)      # EUP slot
            acc_ref[:, c0:c1] = acc_ref[:, c0:c1] * inv_l
        proj = jnp.dot(acc_ref[...].astype(jnp.bfloat16), wp_ref[...],
                       preferred_element_type=jnp.float32)             # (TQ, C)
        o_ref[...] = x_ref[...] + proj + bp_ref[...]


def _pick_tile(s, candidates=(256, 128)):
    # prefer MXU/lane-aligned tiles that still leave >=2 tiles of parallel work
    for t in candidates:
        if s % t == 0 and s // t >= 2:
            return t
    for t in candidates:
        if s % t == 0:
            return t
    return s  # fall back to the full (untiled) sequence


# --------------------------------------------------------------------------
# Wrapper: matches MultiHeadSelfAttention.forward for (B, C, *spatial) input
# --------------------------------------------------------------------------
def multi_head_self_attention(x_nd, params, *, num_heads=1, num_groups=32, eps=1e-5):
    B, C = x_nd.shape[:2]
    spatial = x_nd.shape[2:]
    S = math.prod(spatial)
    assert C % num_groups == 0 and C % num_heads == 0
    cg = C // num_groups
    ch = C // num_heads

    # channels-last (B, S, C); lane axis = channels (C multiple of 128 is ideal)
    x = jnp.transpose(x_nd.astype(jnp.float32).reshape(B, C, S), (0, 2, 1))

    gamma = params["gamma"].reshape(1, C).astype(jnp.float32)
    beta = params["beta"].reshape(1, C).astype(jnp.float32)

    # one-hot channel->group map, built once in the wrapper (hoisted out of kernel)
    gmap = (jnp.arange(C)[:, None] // cg == jnp.arange(num_groups)[None, :]
            ).astype(jnp.float32)                                     # (C, G)

    # fused, pre-transposed qkv weight (C, 3C); fold attention scale ch^-0.5
    # into the q columns of the weight and bias (zero in-kernel cost).
    q_scale = float(ch) ** (-0.5)
    w_qkv_t = jnp.transpose(params["w_qkv"]).astype(jnp.float32)       # (C, 3C)
    w_qkv_t = w_qkv_t.at[:, :C].multiply(q_scale)
    b_qkv = params["b_qkv"].astype(jnp.float32)
    b_qkv = b_qkv.at[:C].multiply(q_scale).reshape(1, 3 * C)
    w_qkv_bf16 = w_qkv_t.astype(jnp.bfloat16)

    w_proj_t = jnp.transpose(params["w_proj"]).astype(jnp.bfloat16)    # (C, C)
    b_proj = params["b_proj"].reshape(1, C).astype(jnp.float32)

    # ---------------- kernel 1: GroupNorm + fused QKV ----------------
    # (assumes the per-batch (S, 3C) activation fits VMEM; true for typical
    #  UNet attention resolutions. Attention itself is tiled in kernel 2.)
    k1 = partial(norm_qkv_kernel, eps=float(eps), inv_n=1.0 / float(cg * S))
    qkv_all = pl.pallas_call(
        k1,
        grid=(B,),
        in_specs=[
            pl.BlockSpec((None, S, C), lambda b: (b, 0, 0)),           # x
            pl.BlockSpec((1, C), lambda b: (0, 0)),                    # gamma
            pl.BlockSpec((1, C), lambda b: (0, 0)),                    # beta
            pl.BlockSpec((C, num_groups), lambda b: (0, 0)),           # group map
            pl.BlockSpec((C, 3 * C), lambda b: (0, 0)),                # W_qkv^T (bf16)
            pl.BlockSpec((1, 3 * C), lambda b: (0, 0)),                # b_qkv
        ],
        out_specs=pl.BlockSpec((None, S, 3 * C), lambda b: (b, 0, 0)),
        out_shape=jax.ShapeDtypeStruct((B, S, 3 * C), jnp.bfloat16),
        compiler_params=pltpu.CompilerParams(
            dimension_semantics=("parallel",),
            vmem_limit_bytes=48 * 1024 * 1024,   # safe budget on v5e/v6e/v7x
        ),
    )(x, gamma, beta, gmap, w_qkv_bf16, b_qkv)

    # ---------------- kernel 2: flash attention + proj + residual ----------------
    TQ = _pick_tile(S)
    TK = _pick_tile(S)
    nq, nk = S // TQ, S // TK

    k2 = partial(flash_attn_proj_kernel, num_heads=num_heads)
    out = pl.pallas_call(
        k2,
        grid=(B, nq, nk),
        in_specs=[
            pl.BlockSpec((None, TQ, C), lambda b, i, j: (b, i, 0)),    # x (residual)
            pl.BlockSpec((None, TQ, C), lambda b, i, j: (b, i, 0)),    # q = qkv[:, :, 0:C]
            pl.BlockSpec((None, TK, C), lambda b, i, j: (b, j, 1)),    # k = qkv[:, :, C:2C]
            pl.BlockSpec((None, TK, C), lambda b, i, j: (b, j, 2)),    # v = qkv[:, :, 2C:3C]
            pl.BlockSpec((C, C), lambda b, i, j: (0, 0)),              # W_proj^T (bf16)
            pl.BlockSpec((1, C), lambda b, i, j: (0, 0)),              # b_proj
        ],
        out_specs=pl.BlockSpec((None, TQ, C), lambda b, i, j: (b, i, 0)),
        out_shape=jax.ShapeDtypeStruct((B, S, C), jnp.float32),
        scratch_shapes=[
            pltpu.VMEM((TQ, num_heads), jnp.float32),   # running max m
            pltpu.VMEM((TQ, num_heads), jnp.float32),   # running sum l
            pltpu.VMEM((TQ, C), jnp.float32),           # output accumulator
        ],
        compiler_params=pltpu.CompilerParams(
            dimension_semantics=("parallel", "parallel", "arbitrary"),
            vmem_limit_bytes=48 * 1024 * 1024,
        ),
    )(x, qkv_all, qkv_all, qkv_all, w_proj_t, b_proj)

    return jnp.transpose(out, (0, 2, 1)).reshape(x_nd.shape)


# --------------------------------------------------------------------------
# Pure-JAX reference (mirrors the PyTorch forward, f32) for validation
# --------------------------------------------------------------------------
def reference_mhsa(x_nd, params, *, num_heads=1, num_groups=32, eps=1e-5):
    B, C = x_nd.shape[:2]
    T = math.prod(x_nd.shape[2:])
    x = x_nd.reshape(B, C, T).astype(jnp.float32)

    xg = x.reshape(B, num_groups, (C // num_groups) * T)
    mean = jnp.mean(xg, axis=-1, keepdims=True)
    var = jnp.mean((xg - mean) ** 2, axis=-1, keepdims=True)
    h = ((xg - mean) / jnp.sqrt(var + eps)).reshape(B, C, T)
    h = h * params["gamma"][None, :, None] + params["beta"][None, :, None]

    qkv = jnp.einsum("oc,bct->bot", params["w_qkv"], h) + params["b_qkv"][None, :, None]
    ch = C // num_heads
    q, k, v = jnp.split(qkv, 3, axis=1)
    q = q.reshape(B * num_heads, ch, T)
    k = k.reshape(B * num_heads, ch, T)
    v = v.reshape(B * num_heads, ch, T)
    scale = 1.0 / math.sqrt(math.sqrt(ch))
    w = jnp.einsum("bct,bcs->bts", q * scale, k * scale)
    w = jax.nn.softmax(w, axis=-1)
    a = jnp.einsum("bts,bcs->bct", w, v).reshape(B, C, T)
    h_out = jnp.einsum("oc,bct->bot", params["w_proj"], a) + params["b_proj"][None, :, None]
    return (x + h_out).reshape(x_nd.shape)


if __name__ == "__main__":
    # GroupNorm(32) requires C % 32 == 0; C=128 keeps every lane/MXU pass dense.
    B, C, H, W = 2, 128, 16, 16          # S = 256 -> 2 query tiles x 2 kv tiles
    num_heads = 1                         # module default (literal spec semantics)

    key = jax.random.PRNGKey(0)
    ks = jax.random.split(key, 7)
    x = jax.random.normal(ks[0], (B, C, H, W), dtype=jnp.float32)

    params = {
        "gamma": 1.0 + 0.1 * jax.random.normal(ks[1], (C,), dtype=jnp.float32),
        "beta": 0.1 * jax.random.normal(ks[2], (C,), dtype=jnp.float32),
        # torch Conv1d(C, 3C, 1) weight is (3C, C, 1) -> stored here as (3C, C)
        "w_qkv": 0.1 * jax.random.normal(ks[3], (3 * C, C), dtype=jnp.float32),
        "b_qkv": 0.1 * jax.random.normal(ks[4], (3 * C,), dtype=jnp.float32),
        # proj_out is zero-initialized in the module; use random values to test math
        "w_proj": 0.1 * jax.random.normal(ks[5], (C, C), dtype=jnp.float32),
        "b_proj": 0.1 * jax.random.normal(ks[6], (C,), dtype=jnp.float32),
    }

    out = jax.block_until_ready(
        multi_head_self_attention(x, params, num_heads=num_heads))
    ref = jax.block_until_ready(
        reference_mhsa(x, params, num_heads=num_heads))

    assert out.shape == (B, C, H, W)
    max_err = float(jnp.max(jnp.abs(out - ref)))
    assert jnp.allclose(out, ref, atol=5e-2, rtol=5e-2), f"max abs err {max_err}"
    print("KERNEL_OK")
</pallas_src>

<mosaic_0001>
module attributes {stable_mosaic.version = 11 : i64} {
  func.func @norm_qkv_kernel(%arg0: i32, %arg1: memref<1x256x128xf32, #tpu.memory_space<vmem>>, %arg2: memref<1x128xf32, #tpu.memory_space<vmem>>, %arg3: memref<1x128xf32, #tpu.memory_space<vmem>>, %arg4: memref<128x32xf32, #tpu.memory_space<vmem>>, %arg5: memref<128x384xbf16, #tpu.memory_space<vmem>>, %arg6: memref<1x384xf32, #tpu.memory_space<vmem>>, %arg7: memref<1x256x384xbf16, #tpu.memory_space<vmem>>) attributes {dimension_semantics = [#tpu.dimension_semantics<parallel>], iteration_bounds = array<i64: 2>, scalar_prefetch = 0 : i64, scratch_operands = 0 : i64, tpu.core_type = #tpu.core_type<tc>, window_params = [{transform_indices = @transform_0, window_bounds = array<i64: 1, 256, 128>}, {pipeline_mode = #tpu.pipeline_mode<synchronous>, transform_indices = @transform_1, window_bounds = array<i64: 1, 128>}, {pipeline_mode = #tpu.pipeline_mode<synchronous>, transform_indices = @transform_2, window_bounds = array<i64: 1, 128>}, {pipeline_mode = #tpu.pipeline_mode<synchronous>, transform_indices = @transform_3, window_bounds = array<i64: 128, 32>}, {pipeline_mode = #tpu.pipeline_mode<synchronous>, transform_indices = @transform_4, window_bounds = array<i64: 128, 384>}, {pipeline_mode = #tpu.pipeline_mode<synchronous>, transform_indices = @transform_5, window_bounds = array<i64: 1, 384>}, {transform_indices = @transform_6, window_bounds = array<i64: 1, 256, 384>}]} {
    %c0 = arith.constant 0 : index
    %c0_0 = arith.constant 0 : index
    %c0_1 = arith.constant 0 : index
    %0 = vector.load %arg1[%c0, %c0_0, %c0_1] : memref<1x256x128xf32, #tpu.memory_space<vmem>>, vector<1x256x128xf32>
    %1 = vector.shape_cast %0 : vector<1x256x128xf32> to vector<256x128xf32>
    %c0_2 = arith.constant 0 : index
    %c0_3 = arith.constant 0 : index
    %2 = vector.load %arg4[%c0_2, %c0_3] : memref<128x32xf32, #tpu.memory_space<vmem>>, vector<128x32xf32>
    %cst = arith.constant dense<0.000000e+00> : vector<128xf32>
    %3 = vector.multi_reduction <add>, %1, %cst [0] : vector<256x128xf32> to vector<128xf32>
    %4 = vector.shape_cast %3 : vector<128xf32> to vector<1x128xf32>
    %cst_4 = arith.constant dense<0.000000e+00> : vector<1x32xf32>
    %5 = tpu.matmul %4, %2, %cst_4 {dimension_numbers = #tpu.dot_dimension_numbers<[1], [0], [0], [1], [0, 0, 1, 1], [], []>} : vector<1x128xf32>, vector<128x32xf32>, vector<1x32xf32> -> vector<1x32xf32>
    %cst_5 = arith.constant 9.765625E-4 : f32
    %6 = vector.broadcast %cst_5 : f32 to vector<1x32xf32>
    %7 = arith.mulf %5, %6 : vector<1x32xf32>
    %cst_6 = arith.constant dense<0.000000e+00> : vector<1x128xf32>
    %8 = tpu.matmul %7, %2, %cst_6 {dimension_numbers = #tpu.dot_dimension_numbers<[1], [1], [0], [0], [0, 0, 1, 0], [], []>} : vector<1x32xf32>, vector<128x32xf32>, vector<1x128xf32> -> vector<1x128xf32>
    %9 = vector.broadcast %8 : vector<1x128xf32> to vector<256x128xf32>
    %10 = arith.subf %1, %9 : vector<256x128xf32>
    %11 = arith.mulf %10, %10 : vector<256x128xf32>
    %cst_7 = arith.constant dense<0.000000e+00> : vector<128xf32>
    %12 = vector.multi_reduction <add>, %11, %cst_7 [0] : vector<256x128xf32> to vector<128xf32>
    %13 = vector.shape_cast %12 : vector<128xf32> to vector<1x128xf32>
    %cst_8 = arith.constant dense<0.000000e+00> : vector<1x32xf32>
    %14 = tpu.matmul %13, %2, %cst_8 {dimension_numbers = #tpu.dot_dimension_numbers<[1], [0], [0], [1], [0, 0, 1, 1], [], []>} : vector<1x128xf32>, vector<128x32xf32>, vector<1x32xf32> -> vector<1x32xf32>
    %cst_9 = arith.constant 9.765625E-4 : f32
    %15 = vector.broadcast %cst_9 : f32 to vector<1x32xf32>
    %16 = arith.mulf %14, %15 : vector<1x32xf32>
    %cst_10 = arith.constant dense<0.000000e+00> : vector<1x128xf32>
    %17 = tpu.matmul %16, %2, %cst_10 {dimension_numbers = #tpu.dot_dimension_numbers<[1], [1], [0], [0], [0, 0, 1, 0], [], []>} : vector<1x32xf32>, vector<128x32xf32>, vector<1x128xf32> -> vector<1x128xf32>
    %cst_11 = arith.constant 9.99999974E-6 : f32
    %18 = vector.broadcast %cst_11 : f32 to vector<1x128xf32>
    %19 = arith.addf %17, %18 : vector<1x128xf32>
    %20 = math.rsqrt %19 : vector<1x128xf32>
    %c0_12 = arith.constant 0 : index
    %c0_13 = arith.constant 0 : index
    %21 = vector.load %arg2[%c0_12, %c0_13] : memref<1x128xf32, #tpu.memory_space<vmem>>, vector<1x128xf32>
    %22 = arith.mulf %20, %21 : vector<1x128xf32>
    %23 = vector.broadcast %22 : vector<1x128xf32> to vector<256x128xf32>
    %24 = arith.mulf %10, %23 : vector<256x128xf32>
    %c0_14 = arith.constant 0 : index
    %c0_15 = arith.constant 0 : index
    %25 = vector.load %arg3[%c0_14, %c0_15] : memref<1x128xf32, #tpu.memory_space<vmem>>, vector<1x128xf32>
    %26 = vector.broadcast %25 : vector<1x128xf32> to vector<256x128xf32>
    %27 = arith.addf %24, %26 : vector<256x128xf32>
    %28 = arith.truncf %27 : vector<256x128xf32> to vector<256x128xbf16>
    %c0_16 = arith.constant 0 : index
    %c0_17 = arith.constant 0 : index
    %29 = vector.load %arg5[%c0_16, %c0_17] : memref<128x384xbf16, #tpu.memory_space<vmem>>, vector<128x384xbf16>
    %cst_18 = arith.constant dense<0.000000e+00> : vector<256x384xf32>
    %30 = tpu.matmul %28, %29, %cst_18 {dimension_numbers = #tpu.dot_dimension_numbers<[1], [0], [0], [1], [0, 0, 1, 1], [], []>} : vector<256x128xbf16>, vector<128x384xbf16>, vector<256x384xf32> -> vector<256x384xf32>
    %c0_19 = arith.constant 0 : index
    %c0_20 = arith.constant 0 : index
    %31 = vector.load %arg6[%c0_19, %c0_20] : memref<1x384xf32, #tpu.memory_space<vmem>>, vector<1x384xf32>
    %32 = vector.broadcast %31 : vector<1x384xf32> to vector<256x384xf32>
    %33 = arith.addf %30, %32 : vector<256x384xf32>
    %34 = arith.truncf %33 : vector<256x384xf32> to vector<256x384xbf16>
    %c0_21 = arith.constant 0 : index
    %c0_22 = arith.constant 0 : index
    %c0_23 = arith.constant 0 : index
    %35 = vector.load %arg7[%c0_21, %c0_22, %c0_23] : memref<1x256x384xbf16, #tpu.memory_space<vmem>>, vector<1x256x384xbf16>
    %36 = vector.shape_cast %35 : vector<1x256x384xbf16> to vector<256x384xbf16>
    %37 = vector.shape_cast %34 : vector<256x384xbf16> to vector<1x256x384xbf16>
    tpu.vector_store %arg7[%c0_21, %c0_22, %c0_23], %37 {strides = array<i32>} : memref<1x256x384xbf16, #tpu.memory_space<vmem>>, vector<1x256x384xbf16>,
    return
  }
  func.func @transform_0(%arg0: i32) -> (i32, i32, i32) {
    %c0_i32 = arith.constant 0 : i32
    %c0_i32_0 = arith.constant 0 : i32
    %c0_i32_1 = arith.constant 0 : i32
    return %arg0, %c0_i32, %c0_i32_0 : i32, i32, i32
  }
  func.func @transform_1(%arg0: i32) -> (i32, i32) {
    %c0_i32 = arith.constant 0 : i32
    %c0_i32_0 = arith.constant 0 : i32
    %c0_i32_1 = arith.constant 0 : i32
    return %c0_i32, %c0_i32_0 : i32, i32
  }
  func.func @transform_2(%arg0: i32) -> (i32, i32) {
    %c0_i32 = arith.constant 0 : i32
    %c0_i32_0 = arith.constant 0 : i32
    %c0_i32_1 = arith.constant 0 : i32
    return %c0_i32, %c0_i32_0 : i32, i32
  }
  func.func @transform_3(%arg0: i32) -> (i32, i32) {
    %c0_i32 = arith.constant 0 : i32
    %c0_i32_0 = arith.constant 0 : i32
    %c0_i32_1 = arith.constant 0 : i32
    return %c0_i32, %c0_i32_0 : i32, i32
  }
  func.func @transform_4(%arg0: i32) -> (i32, i32) {
    %c0_i32 = arith.constant 0 : i32
    %c0_i32_0 = arith.constant 0 : i32
    %c0_i32_1 = arith.constant 0 : i32
    return %c0_i32, %c0_i32_0 : i32, i32
  }
  func.func @transform_5(%arg0: i32) -> (i32, i32) {
    %c0_i32 = arith.constant 0 : i32
    %c0_i32_0 = arith.constant 0 : i32
    %c0_i32_1 = arith.constant 0 : i32
    return %c0_i32, %c0_i32_0 : i32, i32
  }
  func.func @transform_6(%arg0: i32) -> (i32, i32, i32) {
    %c0_i32 = arith.constant 0 : i32
    %c0_i32_0 = arith.constant 0 : i32
    %c0_i32_1 = arith.constant 0 : i32
    return %arg0, %c0_i32, %c0_i32_0 : i32, i32, i32
  }
}

</mosaic_0001>

<llo_original>
// kernel: tpu_custom_call.1
$region0: #{tpu_custom_call.1}
  #allocation0 [shape = 'u32[]', space=smem, size = 0x4, offset = 0x4, fixed_abs, tag = 'smem constant byte address 0x4 - core index']
  #allocation1 [shape = 'u32[72,128]{1,0:T(1,128)}', space=vmem, size = 0x9000, scoped, tag = 'internal scratch']
  %s0 = inlined_call_operand.hbm [shape: f32[2,256,128], index: 0, kind: input, shape index: {}]
  %s1 = inlined_call_operand.vmem [shape: f32[1,128], index: 1, kind: input, shape index: {}]
  %s2 = inlined_call_operand.vmem [shape: f32[1,128], index: 2, kind: input, shape index: {}]
  %s3 = inlined_call_operand.vmem [shape: f32[128,32], index: 3, kind: input, shape index: {}]
  %s4 = inlined_call_operand.hbm [shape: bf16[128,384], index: 4, kind: input, shape index: {}]
  %s5 = inlined_call_operand.vmem [shape: f32[1,384], index: 5, kind: input, shape index: {}]
  %s6 = inlined_call_operand.hbm [shape: bf16[2,256,384], index: 6, kind: output, shape index: {}]
  %s7 = sld [smem:[#allocation0]]
  $region65: #{tpu_custom_call.1} parent=0
    _
  %s9 = ssub.s32 1, %s7
  %s10 = scalar_select 0, %s9, %s7
  $region1: #{tpu_custom_call.1} parent=0
    #allocation2 [shape = 'u8[262144]{0}', space=vmem, size = 0x40000, scoped, tag = 'input window, operand 0']
    #allocation3 [shape = 's32[2]{0}', space=sflag, size = 0x8, scoped, tag = 'scoped memory for tpu_custom_call.1']
    #allocation4 [shape = 's32[2]{0}', space=sflag, size = 0x8, scoped, tag = 'scoped memory for tpu_custom_call.1']
    #allocation5 [shape = 'u8[98304]{0}', space=vmem, size = 0x18000, scoped, tag = 'input window, operand 4, single buffered']
    #allocation6 [shape = 's32[1]{0}', space=sflag, size = 0x4, scoped, tag = 'scoped memory for tpu_custom_call.1']
    #allocation7 [shape = 'u8[393216]{0}', space=vmem, size = 0x60000, scoped, tag = 'output window, operand 0']
    %11 = vsyncpa [#allocation3], 0
    %s12 = scalar_lea.sflag [#allocation3], 1
    %13 = vsyncpa %s12, 0
    %14 = vsyncpa [#allocation6], 0
    %15 = vsyncpa [#allocation4], 0
    %s16 = scalar_lea.sflag [#allocation4], 1
    %17 = vsyncpa %s16, 0
    loop: start=0, step=1, limit=4
    $region2: #{tpu_custom_call.1} parent=1 // loop_pre_header
      _
    $region3: #{tpu_custom_call.1} parent=1 // loop_header
      %s19 = sphi 0, %s23
      %p20 = scmp.ge.s32.totalorder %s19, 4
      %s29 = sphi 0, %s31
      %s32 = sphi 0, %s29
      %s33 = sphi 0, %s32
      %s49 = sphi 0, %s33
      %s53 = sphi 0, %s53
      %s55 = sphi 0, %s53
      %s56 = sphi 0, %s55
      %s70 = sphi 0, %s56
      %s74 = sphi 0, %s74
      %s76 = sphi 0, %s74
      %s77 = sphi 0, %s76
      %s91 = sphi 0, %s77
      %s95 = sphi 0, %s95
      %s97 = sphi 0, %s95
      %s98 = sphi 0, %s97
      %s112 = sphi 0, %s98
      %s116 = sphi 0, %s116
      %s118 = sphi 0, %s116
      %s119 = sphi 0, %s118
      %s133 = sphi 0, %s119
      %s137 = sphi 0, %s137
      %s139 = sphi 0, %s137
      %s140 = sphi 0, %s139
      %s154 = sphi 0, %s140
      %s160 = sphi 0, %s162
      %s163 = sphi 0, %s160
      %s164 = sphi 0, %s163
      %s180 = sphi 0, %s164
    $region4: #{tpu_custom_call.1} parent=1 // loop_header_branch
      %22 = sbr.rel (%p20) target = $region8
    $region5: #{tpu_custom_call.1} parent=1 // loop_body
      %s24 = ssub.s32 %s19, 1
      %s25 = ssub.s32 %s19, 2
      %s26 = sadd.s32 %s19, 1
      %s27 = ssub.s32 %s19, %s26
      %p28 = scmp.eq.s32.totalorder %s27, 0
      %s30 = sadd.s32 %s29, 1
      %s31 = scalar_select %p28, %s29, %s30
      %p34 = pneg %p28
      %p35 = scmp.eq.s32.totalorder %s19, 1
      %p36 = por %p34, %p35
      %p37 = scmp.ne.s32.totalorder %s29, %s32
      %p38 = scmp.eq.s32.totalorder %s19, 0
      %p39 = por %p37, %p38
      %p40 = scmp.ne.s32.totalorder %s29, %s32
      %p41 = scmp.eq.s32.totalorder %s24, 1
      %p42 = por %p40, %p41
      %p43 = scmp.ne.s32.totalorder %s32, %s33
      %p44 = scmp.eq.s32.totalorder %s24, 0
      %p45 = por %p43, %p44
      %p46 = scmp.ne.s32.totalorder %s32, %s33
      %p47 = scmp.eq.s32.totalorder %s25, 1
      %p48 = por %p46, %p47
      %p50 = scmp.ne.s32.totalorder %s33, %s49
      %p51 = scmp.eq.s32.totalorder %s25, 0
      %p52 = por %p50, %p51
      %s54 = sadd.s32 %s53, 1
      %p57 = scmp.eq.s32.totalorder %s19, 1
      %p58 = scmp.ne.s32.totalorder %s53, %s55
      %p59 = scmp.eq.s32.totalorder %s19, 0
      %p60 = por %p58, %p59
      %p61 = scmp.ne.s32.totalorder %s53, %s55
      %p62 = scmp.eq.s32.totalorder %s24, 1
      %p63 = por %p61, %p62
      %p64 = scmp.ne.s32.totalorder %s55, %s56
      %p65 = scmp.eq.s32.totalorder %s24, 0
      %p66 = por %p64, %p65
      %p67 = scmp.ne.s32.totalorder %s55, %s56
      %p68 = scmp.eq.s32.totalorder %s25, 1
      %p69 = por %p67, %p68
      %p71 = scmp.ne.s32.totalorder %s56, %s70
      %p72 = scmp.eq.s32.totalorder %s25, 0
      %p73 = por %p71, %p72
      %s75 = sadd.s32 %s74, 1
      %p78 = scmp.eq.s32.totalorder %s19, 1
      %p79 = scmp.ne.s32.totalorder %s74, %s76
      %p80 = scmp.eq.s32.totalorder %s19, 0
      %p81 = por %p79, %p80
      %p82 = scmp.ne.s32.totalorder %s74, %s76
      %p83 = scmp.eq.s32.totalorder %s24, 1
      %p84 = por %p82, %p83
      %p85 = scmp.ne.s32.totalorder %s76, %s77
      %p86 = scmp.eq.s32.totalorder %s24, 0
      %p87 = por %p85, %p86
      %p88 = scmp.ne.s32.totalorder %s76, %s77
      %p89 = scmp.eq.s32.totalorder %s25, 1
      %p90 = por %p88, %p89
      %p92 = scmp.ne.s32.totalorder %s77, %s91
      %p93 = scmp.eq.s32.totalorder %s25, 0
      %p94 = por %p92, %p93
      %s96 = sadd.s32 %s95, 1
      %p99 = scmp.eq.s32.totalorder %s19, 1
      %p100 = scmp.ne.s32.totalorder %s95, %s97
      %p101 = scmp.eq.s32.totalorder %s19, 0
      %p102 = por %p100, %p101
      %p103 = scmp.ne.s32.totalorder %s95, %s97
      %p104 = scmp.eq.s32.totalorder %s24, 1
      %p105 = por %p103, %p104
      %p106 = scmp.ne.s32.totalorder %s97, %s98
      %p107 = scmp.eq.s32.totalorder %s24, 0
      %p108 = por %p106, %p107
      %p109 = scmp.ne.s32.totalorder %s97, %s98
      %p110 = scmp.eq.s32.totalorder %s25, 1
      %p111 = por %p109, %p110
      %p113 = scmp.ne.s32.totalorder %s98, %s112
      %p114 = scmp.eq.s32.totalorder %s25, 0
      %p115 = por %p113, %p114
      %s117 = sadd.s32 %s116, 1
      %p120 = scmp.eq.s32.totalorder %s19, 1
      %p121 = scmp.ne.s32.totalorder %s116, %s118
      %p122 = scmp.eq.s32.totalorder %s19, 0
      %p123 = por %p121, %p122
      %p124 = scmp.ne.s32.totalorder %s116, %s118
      %p125 = scmp.eq.s32.totalorder %s24, 1
      %p126 = por %p124, %p125
      %p127 = scmp.ne.s32.totalorder %s118, %s119
      %p128 = scmp.eq.s32.totalorder %s24, 0
      %p129 = por %p127, %p128
      %p130 = scmp.ne.s32.totalorder %s118, %s119
      %p131 = scmp.eq.s32.totalorder %s25, 1
      %p132 = por %p130, %p131
      %p134 = scmp.ne.s32.totalorder %s119, %s133
      %p135 = scmp.eq.s32.totalorder %s25, 0
      %p136 = por %p134, %p135
      %s138 = sadd.s32 %s137, 1
      %p141 = scmp.eq.s32.totalorder %s19, 1
      %p142 = scmp.ne.s32.totalorder %s137, %s139
      %p143 = scmp.eq.s32.totalorder %s19, 0
      %p144 = por %p142, %p143
      %p145 = scmp.ne.s32.totalorder %s137, %s139
      %p146 = scmp.eq.s32.totalorder %s24, 1
      %p147 = por %p145, %p146
      %p148 = scmp.ne.s32.totalorder %s139, %s140
      %p149 = scmp.eq.s32.totalorder %s24, 0
      %p150 = por %p148, %p149
      %p151 = scmp.ne.s32.totalorder %s139, %s140
      %p152 = scmp.eq.s32.totalorder %s25, 1
      %p153 = por %p151, %p152
      %p155 = scmp.ne.s32.totalorder %s140, %s154
      %p156 = scmp.eq.s32.totalorder %s25, 0
      %p157 = por %p155, %p156
      %s158 = ssub.s32 %s19, %s26
      %p159 = scmp.eq.s32.totalorder %s158, 0
      %s161 = sadd.s32 %s160, 1
      %s162 = scalar_select %p159, %s160, %s161
      %p165 = pneg %p159
      %p166 = scmp.eq.s32.totalorder %s19, 1
      %p167 = por %p165, %p166
      %p168 = scmp.ne.s32.totalorder %s160, %s163
      %p169 = scmp.eq.s32.totalorder %s19, 0
      %p170 = por %p168, %p169
      %p171 = scmp.ne.s32.totalorder %s160, %s163
      %p172 = scmp.eq.s32.totalorder %s24, 1
      %p173 = por %p171, %p172
      %p174 = scmp.ne.s32.totalorder %s163, %s164
      %p175 = scmp.eq.s32.totalorder %s24, 0
      %p176 = por %p174, %p175
      %p177 = scmp.ne.s32.totalorder %s163, %s164
      %p178 = scmp.eq.s32.totalorder %s25, 1
      %p179 = por %p177, %p178
      %p181 = scmp.ne.s32.totalorder %s164, %s180
      %p182 = scmp.eq.s32.totalorder %s25, 0
      %p183 = por %p181, %p182
      %p184 = scmp.le.s32.totalorder 1, %s19
      %p185 = scmp.lt.s32.totalorder %s19, 3
      %p186 = pnand %p184, %p185
      %p187 = pneg %p186
      // Predicated region
      $region9: #{tpu_custom_call.1} parent=5 // pred_check
        _
      $region10: #{tpu_custom_call.1} parent=5 // pred_check_branch
        %189 = sbr.rel (%p186) target = $region12
      $region11: #{tpu_custom_call.1} parent=5 // pred_region
        %s190 = ssub.s32 %s19, 1
        // Predicated region
        $region13: #{tpu_custom_call.1} parent=11 // pred_check
          %p191 = pneg %p66
        $region14: #{tpu_custom_call.1} parent=11 // pred_check_branch
          %193 = sbr.rel (%p191) target = $region16
        $region15: #{tpu_custom_call.1} parent=11 // pred_region
          _
        $region16: #{tpu_custom_call.1} parent=11 // pred_fallthru
          _
        // Predicated region
        $region17: #{tpu_custom_call.1} parent=11 // pred_check
          %p194 = pneg %p87
        $region18: #{tpu_custom_call.1} parent=11 // pred_check_branch
          %196 = sbr.rel (%p194) target = $region20
        $region19: #{tpu_custom_call.1} parent=11 // pred_region
          _
        $region20: #{tpu_custom_call.1} parent=11 // pred_fallthru
          _
        // Predicated region
        $region21: #{tpu_custom_call.1} parent=11 // pred_check
          %p197 = pneg %p108
        $region22: #{tpu_custom_call.1} parent=11 // pred_check_branch
          %199 = sbr.rel (%p197) target = $region24
        $region23: #{tpu_custom_call.1} parent=11 // pred_region
          _
        $region24: #{tpu_custom_call.1} parent=11 // pred_fallthru
          _
        // Predicated region
        $region25: #{tpu_custom_call.1} parent=11 // pred_check
          %p200 = pneg %p129
        $region26: #{tpu_custom_call.1} parent=11 // pred_check_branch
          %202 = sbr.rel (%p200) target = $region28
        $region27: #{tpu_custom_call.1} parent=11 // pred_region
          %204 = vsyncadd [#allocation6], 0
          %s205 = sshll.u32 %s4, 4
          %s206 = int_to_ptr.hbm [resolvable:$true] %s205
          %s207 = sshll.u32 [#allocation5], 4
          %s208 = int_to_ptr.vmem [resolvable:$true] %s207
          %213 = dma.hbm_to_vmem [thread:$0]  %s206, 3072, %s208, [#allocation6], 192, 192, 12
        $region28: #{tpu_custom_call.1} parent=11 // pred_fallthru
          _
        // Predicated region
        $region29: #{tpu_custom_call.1} parent=11 // pred_check
          %p214 = pneg %p150
        $region30: #{tpu_custom_call.1} parent=11 // pred_check_branch
          %216 = sbr.rel (%p214) target = $region32
        $region31: #{tpu_custom_call.1} parent=11 // pred_region
          _
        $region32: #{tpu_custom_call.1} parent=11 // pred_fallthru
          _
      $region12: #{tpu_custom_call.1} parent=5 // pred_fallthru
        _
      %p217 = scmp.lt.s32.totalorder %s19, 2
      // Predicated region
      $region33: #{tpu_custom_call.1} parent=5 // pred_check
        %p218 = pneg %p217
      $region34: #{tpu_custom_call.1} parent=5 // pred_check_branch
        %220 = sbr.rel (%p218) target = $region36
      $region35: #{tpu_custom_call.1} parent=5 // pred_region
        // Predicated region
        $region37: #{tpu_custom_call.1} parent=35 // pred_check
          %p221 = pneg %p39
        $region38: #{tpu_custom_call.1} parent=35 // pred_check_branch
          %223 = sbr.rel (%p221) target = $region40
        $region39: #{tpu_custom_call.1} parent=35 // pred_region
          %s224 = sand.u32 %s29, 1
          %s225 = scalar_lea.sflag [#allocation3], %s224
          %s226 = sand.u32 %s29, 1
          %s227 = smul.addr %s226, 256
          %s228 = scalar_lea.vmem [#allocation2], %s227
          %230 = vsyncadd %s225, 0
          %s231 = smul.addr %s19, 32
          %s232 = smul.addr %s231, 8
          %s233 = scalar_lea.hbm %s0, %s232
          %s234 = sshll.u32 %s233, 4
          %s235 = int_to_ptr.hbm [resolvable:$true] %s234
          %s236 = sshll.u32 %s228, 4
          %s237 = int_to_ptr.vmem [resolvable:$true] %s236
          %242 = dma.hbm_to_vmem [thread:$0]  %s235, 4096, %s237, %s225, 128, 128, 8
        $region40: #{tpu_custom_call.1} parent=35 // pred_fallthru
          _
      $region36: #{tpu_custom_call.1} parent=5 // pred_fallthru
        _
      %p243 = scmp.le.s32.totalorder 1, %s19
      %p244 = scmp.lt.s32.totalorder %s19, 3
      %p245 = pnand %p243, %p244
      %p246 = pneg %p245
      // Predicated region
      $region41: #{tpu_custom_call.1} parent=5 // pred_check
        _
      $region42: #{tpu_custom_call.1} parent=5 // pred_check_branch
        %248 = sbr.rel (%p245) target = $region44
      $region43: #{tpu_custom_call.1} parent=5 // pred_region
        %s249 = ssub.s32 %s19, 1
        %s250 = sand.u32 %s32, 1
        %s251 = scalar_lea.sflag [#allocation3], %s250
        %s252 = sand.u32 %s32, 1
        %s253 = smul.addr %s252, 256
        %s254 = scalar_lea.vmem [#allocation2], %s253
        // Predicated region
        $region45: #{tpu_custom_call.1} parent=43 // pred_check
          %p255 = pneg %p45
        $region46: #{tpu_custom_call.1} parent=43 // pred_check_branch
          %257 = sbr.rel (%p255) target = $region48
        $region47: #{tpu_custom_call.1} parent=43 // pred_region
          %259 = dma.done %s251, 4096
        $region48: #{tpu_custom_call.1} parent=43 // pred_fallthru
          _
        // Predicated region
        $region49: #{tpu_custom_call.1} parent=43 // pred_check
          %p260 = pneg %p129
        $region50: #{tpu_custom_call.1} parent=43 // pred_check_branch
          %262 = sbr.rel (%p260) target = $region52
        $region51: #{tpu_custom_call.1} parent=43 // pred_region
          %264 = dma.done [#allocation6], 3072
        $region52: #{tpu_custom_call.1} parent=43 // pred_fallthru
          _
        %s265 = sand.u32 %s32, 1
        %s266 = scalar_lea.sflag [#allocation3], %s265
        %s267 = sand.u32 %s32, 1
        %s268 = smul.addr %s267, 256
        %s269 = scalar_lea.vmem [#allocation2], %s268
        %p270 = pneg %p45
        %p271 = pneg %p42
        %p272 = pneg %p66
        %p273 = pneg %p63
        %p274 = pneg %p87
        %p275 = pneg %p84
        %p276 = pneg %p108
        %p277 = pneg %p105
        %p278 = pneg %p129
        %p279 = pneg %p126
        %p280 = pneg %p150
        %p281 = pneg %p147
        %p282 = pneg %p176
        %p283 = pneg %p173
        %s284 = sand.u32 %s163, 1
        %s285 = scalar_lea.sflag [#allocation4], %s284
        %s286 = sand.u32 %s163, 1
        %s287 = smul.addr %s286, 384
        %s288 = scalar_lea.vmem [#allocation7], %s287
        %v289 = vld [vmem:[%s254] sm:$0xff]
        %v290 = vld [vmem:[%s254 + $0x8] sm:$0xff]
        %v291 = vld [vmem:[%s254 + $0x10] sm:$0xff]
        %v292 = vld [vmem:[%s254 + $0x18] sm:$0xff]
        %v293 = vld [vmem:[%s254 + $0x20] sm:$0xff]
        %v294 = vld [vmem:[%s254 + $0x28] sm:$0xff]
        %v295 = vld [vmem:[%s254 + $0x30] sm:$0xff]
        %v296 = vld [vmem:[%s254 + $0x38] sm:$0xff]
        %v297 = vld [vmem:[%s254 + $0x40] sm:$0xff]
        %v298 = vld [vmem:[%s254 + $0x48] sm:$0xff]
        %v299 = vld [vmem:[%s254 + $0x50] sm:$0xff]
        %v300 = vld [vmem:[%s254 + $0x58] sm:$0xff]
        %v301 = vld [vmem:[%s254 + $0x60] sm:$0xff]
        %v302 = vld [vmem:[%s254 + $0x68] sm:$0xff]
        %v303 = vld [vmem:[%s254 + $0x70] sm:$0xff]
        %v304 = vld [vmem:[%s254 + $0x78] sm:$0xff]
        %v305 = vld [vmem:[%s254 + $0x80] sm:$0xff]
        %v306 = vld [vmem:[%s254 + $0x88] sm:$0xff]
        %v307 = vld [vmem:[%s254 + $0x90] sm:$0xff]
        %v308 = vld [vmem:[%s254 + $0x98] sm:$0xff]
        %v309 = vld [vmem:[%s254 + $0xa0] sm:$0xff]
        %v310 = vld [vmem:[%s254 + $0xa8] sm:$0xff]
        %v311 = vld [vmem:[%s254 + $0xb0] sm:$0xff]
        %v312 = vld [vmem:[%s254 + $0xb8] sm:$0xff]
        %v313 = vld [vmem:[%s254 + $0xc0] sm:$0xff]
        %v314 = vld [vmem:[%s254 + $0xc8] sm:$0xff]
        %v315 = vld [vmem:[%s254 + $0xd0] sm:$0xff]
        %v316 = vld [vmem:[%s254 + $0xd8] sm:$0xff]
        %v317 = vld [vmem:[%s254 + $0xe0] sm:$0xff]
        %v318 = vld [vmem:[%s254 + $0xe8] sm:$0xff]
        %v319 = vld [vmem:[%s254 + $0xf0] sm:$0xff]
        %v320 = vld [vmem:[%s254 + $0xf8] sm:$0xff]
        %v321 = vld [vmem:[%s3] sm:$0xff]
        %v322 = vld [vmem:[%s3 + $0x8] sm:$0xff]
        %v323 = vld [vmem:[%s3 + $0x10] sm:$0xff]
        %v324 = vld [vmem:[%s3 + $0x18] sm:$0xff]
        %v325 = vld [vmem:[%s3 + $0x20] sm:$0xff]
        %v326 = vld [vmem:[%s3 + $0x28] sm:$0xff]
        %v327 = vld [vmem:[%s3 + $0x30] sm:$0xff]
        %v328 = vld [vmem:[%s3 + $0x38] sm:$0xff]
        %v329 = vld [vmem:[%s3 + $0x40] sm:$0xff]
        %v330 = vld [vmem:[%s3 + $0x48] sm:$0xff]
        %v331 = vld [vmem:[%s3 + $0x50] sm:$0xff]
        %v332 = vld [vmem:[%s3 + $0x58] sm:$0xff]
        %v333 = vld [vmem:[%s3 + $0x60] sm:$0xff]
        %v334 = vld [vmem:[%s3 + $0x68] sm:$0xff]
        %v335 = vld [vmem:[%s3 + $0x70] sm:$0xff]
        %v336 = vld [vmem:[%s3 + $0x78] sm:$0xff]
        %v337 = vadd.f32 %v289, %v290
        %v338 = vadd.f32 %v337, %v291
        %v339 = vadd.f32 %v338, %v292
        %v340 = vadd.f32 %v339, %v293
        %v341 = vadd.f32 %v340, %v294
        %v342 = vadd.f32 %v341, %v295
        %v343 = vadd.f32 %v342, %v296
        %v344 = vadd.f32 %v343, %v297
        %v345 = vadd.f32 %v344, %v298
        %v346 = vadd.f32 %v345, %v299
        %v347 = vadd.f32 %v346, %v300
        %v348 = vadd.f32 %v347, %v301
        %v349 = vadd.f32 %v348, %v302
        %v350 = vadd.f32 %v349, %v303
        %v351 = vadd.f32 %v350, %v304
        %v352 = vadd.f32 %v351, %v305
        %v353 = vadd.f32 %v352, %v306
        %v354 = vadd.f32 %v353, %v307
        %v355 = vadd.f32 %v354, %v308
        %v356 = vadd.f32 %v355, %v309
        %v357 = vadd.f32 %v356, %v310
        %v358 = vadd.f32 %v357, %v311
        %v359 = vadd.f32 %v358, %v312
        %v360 = vadd.f32 %v359, %v313
        %v361 = vadd.f32 %v360, %v314
        %v362 = vadd.f32 %v361, %v315
        %v363 = vadd.f32 %v362, %v316
        %v364 = vadd.f32 %v363, %v317
        %v365 = vadd.f32 %v364, %v318
        %v366 = vadd.f32 %v365, %v319
        %v367 = vadd.f32 %v366, %v320
        %v368 = vrot.slane %v367, 4
        %v369 = vadd.f32 %v367, %v368
        %v370 = vrot.slane %v369, 2
        %v371 = vadd.f32 %v369, %v370
        %v372 = vrot.slane %v371, 1
        %v373 = vadd.f32 %v371, %v372
        %374 = vmatpush.msra.mxu0 %v336
        %375 = vmatpush.msra.mxu0 %v335
        %376 = vmatpush.msra.mxu0 %v334
        %377 = vmatpush.msra.mxu0 %v333
        %378 = vmatpush.msra.mxu0 %v332
        %379 = vmatpush.msra.mxu0 %v331
        %380 = vmatpush.msra.mxu0 %v330
        %381 = vmatpush.msra.mxu0 %v329
        %382 = vmatpush.msra.mxu0 %v328
        %383 = vmatpush.msra.mxu0 %v327
        %384 = vmatpush.msra.mxu0 %v326
        %385 = vmatpush.msra.mxu0 %v325
        %386 = vmatpush.msra.mxu0 %v324
        %387 = vmatpush.msra.mxu0 %v323
        %388 = vmatpush.msra.mxu0 %v322
        %389 = vmatpush.msra.mxu0 %v321
        %390 = vmatmul.f32.gmra.mxu0 %v373
        %v391 = vpop.f32.mrf.mxu0
        %v392 = vadd.f32 0.0, %v391
        %393 = vdwg.mxu0
        %v394 = vmul.f32 %v392, 0.0009765625
        %vm395 = vcmask 261120
        %v397 = vsel %vm395, %v394, 0
        %v400 = vsel %vm395, %v321, 0
        %v403 = vsel %vm395, %v322, 0
        %v406 = vsel %vm395, %v323, 0
        %v409 = vsel %vm395, %v324, 0
        %v412 = vsel %vm395, %v325, 0
        %v415 = vsel %vm395, %v326, 0
        %v418 = vsel %vm395, %v327, 0
        %v421 = vsel %vm395, %v328, 0
        %v424 = vsel %vm395, %v329, 0
        %v427 = vsel %vm395, %v330, 0
        %v430 = vsel %vm395, %v331, 0
        %v433 = vsel %vm395, %v332, 0
        %v436 = vsel %vm395, %v333, 0
        %v439 = vsel %vm395, %v334, 0
        %v442 = vsel %vm395, %v335, 0
        %v445 = vsel %vm395, %v336, 0
        %447 = vmatpush.xpose.msra.mxu0 %v445
        %448 = vmatpush.xpose.msra.mxu0 %v442
        %449 = vmatpush.xpose.msra.mxu0 %v439
        %450 = vmatpush.xpose.msra.mxu0 %v436
        %451 = vmatpush.xpose.msra.mxu0 %v433
        %452 = vmatpush.xpose.msra.mxu0 %v430
        %453 = vmatpush.xpose.msra.mxu0 %v427
        %454 = vmatpush.xpose.msra.mxu0 %v424
        %455 = vmatpush.xpose.msra.mxu0 %v421
        %456 = vmatpush.xpose.msra.mxu0 %v418
        %457 = vmatpush.xpose.msra.mxu0 %v415
        %458 = vmatpush.xpose.msra.mxu0 %v412
        %459 = vmatpush.xpose.msra.mxu0 %v409
        %460 = vmatpush.xpose.msra.mxu0 %v406
        %461 = vmatpush.xpose.msra.mxu0 %v403
        %462 = vmatpush.xpose.msra.mxu0 %v400
        %463 = vmatmul.f32.gmra.mxu0 %v397
        %v464 = vpop.f32.mrf.mxu0
        %v465 = vadd.f32 0.0, %v464
        %466 = vdwg.mxu0
        %v467 = vperm.slane %v465, 0
        %v468 = vsub.f32 %v289, %v467
        %v469 = vsub.f32 %v290, %v467
        %v470 = vsub.f32 %v291, %v467
        %v471 = vsub.f32 %v292, %v467
        %v472 = vsub.f32 %v293, %v467
        %v473 = vsub.f32 %v294, %v467
        %v474 = vsub.f32 %v295, %v467
        %v475 = vsub.f32 %v296, %v467
        %v476 = vsub.f32 %v297, %v467
        %v477 = vsub.f32 %v298, %v467
        %v478 = vsub.f32 %v299, %v467
        %v479 = vsub.f32 %v300, %v467
        %v480 = vsub.f32 %v301, %v467
        %v481 = vsub.f32 %v302, %v467
        %v482 = vsub.f32 %v303, %v467
        %v483 = vsub.f32 %v304, %v467
        %v484 = vsub.f32 %v305, %v467
        %v485 = vsub.f32 %v306, %v467
        %v486 = vsub.f32 %v307, %v467
        %v487 = vsub.f32 %v308, %v467
        %v488 = vsub.f32 %v309, %v467
        %v489 = vsub.f32 %v310, %v467
        %v490 = vsub.f32 %v311, %v467
        %v491 = vsub.f32 %v312, %v467
        %v492 = vsub.f32 %v313, %v467
        %v493 = vsub.f32 %v314, %v467
        %v494 = vsub.f32 %v315, %v467
        %v495 = vsub.f32 %v316, %v467
        %v496 = vsub.f32 %v317, %v467
        %v497 = vsub.f32 %v318, %v467
        %v498 = vsub.f32 %v319, %v467
        %v499 = vsub.f32 %v320, %v467
        %v500 = vmul.f32 %v468, %v468
        %v501 = vmul.f32 %v469, %v469
        %v502 = vmul.f32 %v470, %v470
        %v503 = vmul.f32 %v471, %v471
        %v504 = vmul.f32 %v472, %v472
        %v505 = vmul.f32 %v473, %v473
        %v506 = vmul.f32 %v474, %v474
        %v507 = vmul.f32 %v475, %v475
        %v508 = vmul.f32 %v476, %v476
        %v509 = vmul.f32 %v477, %v477
        %v510 = vmul.f32 %v478, %v478
        %v511 = vmul.f32 %v479, %v479
        %v512 = vmul.f32 %v480, %v480
        %v513 = vmul.f32 %v481, %v481
        %v514 = vmul.f32 %v482, %v482
        %v515 = vmul.f32 %v483, %v483
        %v516 = vmul.f32 %v484, %v484
        %v517 = vmul.f32 %v485, %v485
        %v518 = vmul.f32 %v486, %v486
        %v519 = vmul.f32 %v487, %v487
        %v520 = vmul.f32 %v488, %v488
        %v521 = vmul.f32 %v489, %v489
        %v522 = vmul.f32 %v490, %v490
        %v523 = vmul.f32 %v491, %v491
        %v524 = vmul.f32 %v492, %v492
        %v525 = vmul.f32 %v493, %v493
        %v526 = vmul.f32 %v494, %v494
        %v527 = vmul.f32 %v495, %v495
        %v528 = vmul.f32 %v496, %v496
        %v529 = vmul.f32 %v497, %v497
        %v530 = vmul.f32 %v498, %v498
        %v531 = vmul.f32 %v499, %v499
        %v532 = vadd.f32 %v500, %v501
        %v533 = vadd.f32 %v532, %v502
        %v534 = vadd.f32 %v533, %v503
        %v535 = vadd.f32 %v534, %v504
        %v536 = vadd.f32 %v535, %v505
        %v537 = vadd.f32 %v536, %v506
        %v538 = vadd.f32 %v537, %v507
        %v539 = vadd.f32 %v538, %v508
        %v540 = vadd.f32 %v539, %v509
        %v541 = vadd.f32 %v540, %v510
        %v542 = vadd.f32 %v541, %v511
        %v543 = vadd.f32 %v542, %v512
        %v544 = vadd.f32 %v543, %v513
        %v545 = vadd.f32 %v544, %v514
        %v546 = vadd.f32 %v545, %v515
        %v547 = vadd.f32 %v546, %v516
        %v548 = vadd.f32 %v547, %v517
        %v549 = vadd.f32 %v548, %v518
        %v550 = vadd.f32 %v549, %v519
        %v551 = vadd.f32 %v550, %v520
        %v552 = vadd.f32 %v551, %v521
        %v553 = vadd.f32 %v552, %v522
        %v554 = vadd.f32 %v553, %v523
        %v555 = vadd.f32 %v554, %v524
        %v556 = vadd.f32 %v555, %v525
        %v557 = vadd.f32 %v556, %v526
        %v558 = vadd.f32 %v557, %v527
        %v559 = vadd.f32 %v558, %v528
        %v560 = vadd.f32 %v559, %v529
        %v561 = vadd.f32 %v560, %v530
        %v562 = vadd.f32 %v561, %v531
        %v563 = vrot.slane %v562, 4
        %v564 = vadd.f32 %v562, %v563
        %v565 = vrot.slane %v564, 2
        %v566 = vadd.f32 %v564, %v565
        %v567 = vrot.slane %v566, 1
        %v568 = vadd.f32 %v566, %v567
        %569 = vmatpush.msra.mxu0 %v336
        %570 = vmatpush.msra.mxu0 %v335
        %571 = vmatpush.msra.mxu0 %v334
        %572 = vmatpush.msra.mxu0 %v333
        %573 = vmatpush.msra.mxu0 %v332
        %574 = vmatpush.msra.mxu0 %v331
        %575 = vmatpush.msra.mxu0 %v330
        %576 = vmatpush.msra.mxu0 %v329
        %577 = vmatpush.msra.mxu0 %v328
        %578 = vmatpush.msra.mxu0 %v327
        %579 = vmatpush.msra.mxu0 %v326
        %580 = vmatpush.msra.mxu0 %v325
        %581 = vmatpush.msra.mxu0 %v324
        %582 = vmatpush.msra.mxu0 %v323
        %583 = vmatpush.msra.mxu0 %v322
        %584 = vmatpush.msra.mxu0 %v321
        %585 = vmatmul.f32.gmra.mxu0 %v568
        %v586 = vpop.f32.mrf.mxu0
        %v587 = vadd.f32 0.0, %v586
        %588 = vdwg.mxu0
        %v589 = vmul.f32 %v587, 0.0009765625
        %v591 = vsel %vm395, %v589, 0
        %593 = vmatpush.xpose.msra.mxu0 %v445
        %594 = vmatpush.xpose.msra.mxu0 %v442
        %595 = vmatpush.xpose.msra.mxu0 %v439
        %596 = vmatpush.xpose.msra.mxu0 %v436
        %597 = vmatpush.xpose.msra.mxu0 %v433
        %598 = vmatpush.xpose.msra.mxu0 %v430
        %599 = vmatpush.xpose.msra.mxu0 %v427
        %600 = vmatpush.xpose.msra.mxu0 %v424
        %601 = vmatpush.xpose.msra.mxu0 %v421
        %602 = vmatpush.xpose.msra.mxu0 %v418
        %603 = vmatpush.xpose.msra.mxu0 %v415
        %604 = vmatpush.xpose.msra.mxu0 %v412
        %605 = vmatpush.xpose.msra.mxu0 %v409
        %606 = vmatpush.xpose.msra.mxu0 %v406
        %607 = vmatpush.xpose.msra.mxu0 %v403
        %608 = vmatpush.xpose.msra.mxu0 %v400
        %609 = vmatmul.f32.gmra.mxu0 %v591
        %v610 = vpop.f32.mrf.mxu0
        %v611 = vadd.f32 1e-05, %v610
        %612 = vdwg.mxu0
        %v613 = vrsqrt.pop %v611
        %v614 = vmul.f32 %v613, %v611
        %v615 = vmul.f32 %v614, %v613
        %v616 = vmul.f32 0.5, %v615
        %v617 = vsub.f32 1.5, %v616
        %v618 = vmul.f32 %v613, %v617
        %vm619 = vweird.f32 %v611
        %vm620 = vweird.f32 %v613
        %vm621 = vmor %vm619, %vm620
        %v622 = vsel %vm621, %v613, %v618
        %v623 = vld [vmem:[%s1] sm:$0x1]
        %v624 = vmul.f32 %v622, %v623
        %v625 = vperm.slane %v624, 0
        %v626 = vmul.f32 %v468, %v625
        %v627 = vmul.f32 %v469, %v625
        %v628 = vmul.f32 %v470, %v625
        %v629 = vmul.f32 %v471, %v625
        %v630 = vmul.f32 %v472, %v625
        %v631 = vmul.f32 %v473, %v625
        %v632 = vmul.f32 %v474, %v625
        %v633 = vmul.f32 %v475, %v625
        %v634 = vmul.f32 %v476, %v625
        %v635 = vmul.f32 %v477, %v625
        %v636 = vmul.f32 %v478, %v625
        %v637 = vmul.f32 %v479, %v625
        %v638 = vmul.f32 %v480, %v625
        %v639 = vmul.f32 %v481, %v625
        %v640 = vmul.f32 %v482, %v625
        %v641 = vmul.f32 %v483, %v625
        %v642 = vmul.f32 %v484, %v625
        %v643 = vmul.f32 %v485, %v625
        %v644 = vmul.f32 %v486, %v625
        %v645 = vmul.f32 %v487, %v625
        %v646 = vmul.f32 %v488, %v625
        %v647 = vmul.f32 %v489, %v625
        %v648 = vmul.f32 %v490, %v625
        %v649 = vmul.f32 %v491, %v625
        %v650 = vmul.f32 %v492, %v625
        %v651 = vmul.f32 %v493, %v625
        %v652 = vmul.f32 %v494, %v625
        %v653 = vmul.f32 %v495, %v625
        %v654 = vmul.f32 %v496, %v625
        %v655 = vmul.f32 %v497, %v625
        %v656 = vmul.f32 %v498, %v625
        %v657 = vmul.f32 %v499, %v625
        %v658 = vld [vmem:[%s2] sm:$0x1]
        %v660 = vperm.slane %v658, 0
        %v662 = vadd.f32 %v626, %v660
        %v663 = vadd.f32 %v627, %v660
        %v664 = vadd.f32 %v628, %v660
        %v665 = vadd.f32 %v629, %v660
        %v666 = vadd.f32 %v630, %v660
        %v667 = vadd.f32 %v631, %v660
        %v668 = vadd.f32 %v632, %v660
        %v669 = vadd.f32 %v633, %v660
        %v670 = vadd.f32 %v634, %v660
        %v671 = vadd.f32 %v635, %v660
        %v672 = vadd.f32 %v636, %v660
        %v673 = vadd.f32 %v637, %v660
        %v674 = vadd.f32 %v638, %v660
        %v675 = vadd.f32 %v639, %v660
        %v676 = vadd.f32 %v640, %v660
        %v677 = vadd.f32 %v641, %v660
        %v678 = vadd.f32 %v642, %v660
        %v679 = vadd.f32 %v643, %v660
        %v680 = vadd.f32 %v644, %v660
        %v681 = vadd.f32 %v645, %v660
        %v682 = vadd.f32 %v646, %v660
        %v683 = vadd.f32 %v647, %v660
        %v684 = vadd.f32 %v648, %v660
        %v685 = vadd.f32 %v649, %v660
        %v686 = vadd.f32 %v650, %v660
        %v687 = vadd.f32 %v651, %v660
        %v688 = vadd.f32 %v652, %v660
        %v689 = vadd.f32 %v653, %v660
        %v690 = vadd.f32 %v654, %v660
        %v691 = vadd.f32 %v655, %v660
        %v692 = vadd.f32 %v656, %v660
        %v693 = vadd.f32 %v657, %v660
        %v694 = vpack.c.bf16 %v663, %v662
        %v695 = vpack.c.bf16 %v665, %v664
        %v696 = vpack.c.bf16 %v667, %v666
        %v697 = vpack.c.bf16 %v669, %v668
        %v698 = vpack.c.bf16 %v671, %v670
        %v699 = vpack.c.bf16 %v673, %v672
        %v700 = vpack.c.bf16 %v675, %v674
        %v701 = vpack.c.bf16 %v677, %v676
        %v702 = vpack.c.bf16 %v679, %v678
        %v703 = vpack.c.bf16 %v681, %v680
        %v704 = vpack.c.bf16 %v683, %v682
        %v705 = vpack.c.bf16 %v685, %v684
        %v706 = vpack.c.bf16 %v687, %v686
        %v707 = vpack.c.bf16 %v689, %v688
        %v708 = vpack.c.bf16 %v691, %v690
        %v709 = vpack.c.bf16 %v693, %v692
        %v710 = vld [vmem:[#allocation5] sm:$0xff]
        %v711 = vld [vmem:[#allocation5 + $0x8] sm:$0xf]
        %v712 = vld [vmem:[#allocation5 + $0xc] sm:$0xff]
        %v713 = vld [vmem:[#allocation5 + $0x14] sm:$0xf]
        %v714 = vld [vmem:[#allocation5 + $0x18] sm:$0xff]
        %v715 = vld [vmem:[#allocation5 + $0x20] sm:$0xf]
        %v716 = vld [vmem:[#allocation5 + $0x24] sm:$0xff]
        %v717 = vld [vmem:[#allocation5 + $0x2c] sm:$0xf]
        %v718 = vld [vmem:[#allocation5 + $0x30] sm:$0xff]
        %v719 = vld [vmem:[#allocation5 + $0x38] sm:$0xf]
        %v720 = vld [vmem:[#allocation5 + $0x3c] sm:$0xff]
        %v721 = vld [vmem:[#allocation5 + $0x44] sm:$0xf]
        %v722 = vld [vmem:[#allocation5 + $0x48] sm:$0xff]
        %v723 = vld [vmem:[#allocation5 + $0x50] sm:$0xf]
        %v724 = vld [vmem:[#allocation5 + $0x54] sm:$0xff]
        %v725 = vld [vmem:[#allocation5 + $0x5c] sm:$0xf]
        %v726 = vld [vmem:[#allocation5 + $0x60] sm:$0xff]
        %v727 = vld [vmem:[#allocation5 + $0x68] sm:$0xf]
        %v728 = vld [vmem:[#allocation5 + $0x6c] sm:$0xff]
        %v729 = vld [vmem:[#allocation5 + $0x74] sm:$0xf]
        %v730 = vld [vmem:[#allocation5 + $0x78] sm:$0xff]
        %v731 = vld [vmem:[#allocation5 + $0x80] sm:$0xf]
        %v732 = vld [vmem:[#allocation5 + $0x84] sm:$0xff]
        %v733 = vld [vmem:[#allocation5 + $0x8c] sm:$0xf]
        %v734 = vld [vmem:[#allocation5 + $0x90] sm:$0xff]
        %v735 = vld [vmem:[#allocation5 + $0x98] sm:$0xf]
        %v736 = vld [vmem:[#allocation5 + $0x9c] sm:$0xff]
        %v737 = vld [vmem:[#allocation5 + $0xa4] sm:$0xf]
        %v738 = vld [vmem:[#allocation5 + $0xa8] sm:$0xff]
        %v739 = vld [vmem:[#allocation5 + $0xb0] sm:$0xf]
        %v740 = vld [vmem:[#allocation5 + $0xb4] sm:$0xff]
        %v741 = vld [vmem:[#allocation5 + $0xbc] sm:$0xf]
        %v742 = vld [vmem:[%s5] sm:$0x7]
        %v744 = vperm.slane %v742, 0
        %v745 = vperm.slane %v742, 1
        %v746 = vperm.slane %v742, 2
        %v782 = vunpack.c.l.b16 %v710
        %v783 = vunpack.c.h.b16 %v710
        %v784 = vunpack.c.l.b16 %v711
        %v785 = vunpack.c.l.b16 %v712
        %v786 = vunpack.c.h.b16 %v712
        %v787 = vunpack.c.l.b16 %v713
        %v788 = vunpack.c.l.b16 %v714
        %v789 = vunpack.c.h.b16 %v714
        %v790 = vunpack.c.l.b16 %v715
        %v791 = vunpack.c.l.b16 %v716
        %v792 = vunpack.c.h.b16 %v716
        %v793 = vunpack.c.l.b16 %v717
        %v794 = vunpack.c.l.b16 %v718
        %v795 = vunpack.c.h.b16 %v718
        %v796 = vunpack.c.l.b16 %v719
        %v797 = vunpack.c.l.b16 %v720
        %v798 = vunpack.c.h.b16 %v720
        %v799 = vunpack.c.l.b16 %v721
        %v800 = vunpack.c.l.b16 %v722
        %v801 = vunpack.c.h.b16 %v722
        %v802 = vunpack.c.l.b16 %v723
        %v803 = vunpack.c.l.b16 %v724
        %v804 = vunpack.c.h.b16 %v724
        %v805 = vunpack.c.l.b16 %v725
        %v806 = vunpack.c.l.b16 %v726
        %v807 = vunpack.c.h.b16 %v726
        %v808 = vunpack.c.l.b16 %v727
        %v809 = vunpack.c.l.b16 %v728
        %v810 = vunpack.c.h.b16 %v728
        %v811 = vunpack.c.l.b16 %v729
        %v812 = vunpack.c.l.b16 %v730
        %v813 = vunpack.c.h.b16 %v730
        %v814 = vunpack.c.l.b16 %v731
        %v815 = vunpack.c.l.b16 %v732
        %v816 = vunpack.c.h.b16 %v732
        %v817 = vunpack.c.l.b16 %v733
        %v818 = vunpack.c.l.b16 %v734
        %v819 = vunpack.c.h.b16 %v734
        %v820 = vunpack.c.l.b16 %v735
        %v821 = vunpack.c.l.b16 %v736
        %v822 = vunpack.c.h.b16 %v736
        %v823 = vunpack.c.l.b16 %v737
        %v824 = vunpack.c.l.b16 %v738
        %v825 = vunpack.c.h.b16 %v738
        %v826 = vunpack.c.l.b16 %v739
        %v827 = vunpack.c.l.b16 %v740
        %v828 = vunpack.c.h.b16 %v740
        %v829 = vunpack.c.l.b16 %v741
        %v830 = vpack.c.b16 %v785, %v782
        %v831 = vpack.c.b16 %v786, %v783
        %v832 = vpack.c.b16 %v787, %v784
        %v833 = vpack.c.b16 %v791, %v788
        %v834 = vpack.c.b16 %v792, %v789
        %v835 = vpack.c.b16 %v793, %v790
        %v836 = vpack.c.b16 %v797, %v794
        %v837 = vpack.c.b16 %v798, %v795
        %v838 = vpack.c.b16 %v799, %v796
        %v839 = vpack.c.b16 %v803, %v800
        %v840 = vpack.c.b16 %v804, %v801
        %v841 = vpack.c.b16 %v805, %v802
        %v842 = vpack.c.b16 %v809, %v806
        %v843 = vpack.c.b16 %v810, %v807
        %v844 = vpack.c.b16 %v811, %v808
        %v845 = vpack.c.b16 %v815, %v812
        %v846 = vpack.c.b16 %v816, %v813
        %v847 = vpack.c.b16 %v817, %v814
        %v848 = vpack.c.b16 %v821, %v818
        %v849 = vpack.c.b16 %v822, %v819
        %v850 = vpack.c.b16 %v823, %v820
        %v851 = vpack.c.b16 %v827, %v824
        %v852 = vpack.c.b16 %v828, %v825
        %v853 = vpack.c.b16 %v829, %v826
        %878 = vmatpush.bf16.msra.mxu0 %v851
        %879 = vmatpush.bf16.msra.mxu0 %v848
        %880 = vmatpush.bf16.msra.mxu0 %v845
        %881 = vmatpush.bf16.msra.mxu0 %v842
        %882 = vmatpush.bf16.msra.mxu0 %v839
        %883 = vmatpush.bf16.msra.mxu0 %v836
        %884 = vmatpush.bf16.msra.mxu0 %v833
        %885 = vmatpush.bf16.msra.mxu0 %v830
        %886 = vmatmul.bf16.gmra.mxu0 %v694
        %v887 = vpop.f32.mrf.mxu0
        %v888 = vadd.f32 %v744, %v887
        %v889 = vpop.f32.mrf.mxu0
        %v890 = vadd.f32 %v744, %v889
        %891 = vmatmul.bf16.gmra.mxu0 %v695
        %v892 = vpop.f32.mrf.mxu0
        %v893 = vadd.f32 %v744, %v892
        %v894 = vpop.f32.mrf.mxu0
        %v895 = vadd.f32 %v744, %v894
        %896 = vmatmul.bf16.gmra.mxu0 %v696
        %v897 = vpop.f32.mrf.mxu0
        %v898 = vadd.f32 %v744, %v897
        %v899 = vpop.f32.mrf.mxu0
        %v900 = vadd.f32 %v744, %v899
        %901 = vmatmul.bf16.gmra.mxu0 %v697
        %v902 = vpop.f32.mrf.mxu0
        %v903 = vadd.f32 %v744, %v902
        %v904 = vpop.f32.mrf.mxu0
        %v905 = vadd.f32 %v744, %v904
        %906 = vmatmul.bf16.gmra.mxu0 %v698
        %v907 = vpop.f32.mrf.mxu0
        %v908 = vadd.f32 %v744, %v907
        %v909 = vpop.f32.mrf.mxu0
        %v910 = vadd.f32 %v744, %v909
        %911 = vmatmul.bf16.gmra.mxu0 %v699
        %v912 = vpop.f32.mrf.mxu0
        %v913 = vadd.f32 %v744, %v912
        %v914 = vpop.f32.mrf.mxu0
        %v915 = vadd.f32 %v744, %v914
        %916 = vmatmul.bf16.gmra.mxu0 %v700
        %v917 = vpop.f32.mrf.mxu0
        %v918 = vadd.f32 %v744, %v917
        %v919 = vpop.f32.mrf.mxu0
        %v920 = vadd.f32 %v744, %v919
        %921 = vmatmul.bf16.gmra.mxu0 %v701
        %v922 = vpop.f32.mrf.mxu0
        %v923 = vadd.f32 %v744, %v922
        %v924 = vpop.f32.mrf.mxu0
        %v925 = vadd.f32 %v744, %v924
        %926 = vmatmul.bf16.gmra.mxu0 %v702
        %v927 = vpop.f32.mrf.mxu0
        %v928 = vadd.f32 %v744, %v927
        %v929 = vpop.f32.mrf.mxu0
        %v930 = vadd.f32 %v744, %v929
        %931 = vmatmul.bf16.gmra.mxu0 %v703
        %v932 = vpop.f32.mrf.mxu0
        %v933 = vadd.f32 %v744, %v932
        %v934 = vpop.f32.mrf.mxu0
        %v935 = vadd.f32 %v744, %v934
        %936 = vmatmul.bf16.gmra.mxu0 %v704
        %v937 = vpop.f32.mrf.mxu0
        %v938 = vadd.f32 %v744, %v937
        %v939 = vpop.f32.mrf.mxu0
        %v940 = vadd.f32 %v744, %v939
        %941 = vmatmul.bf16.gmra.mxu0 %v705
        %v942 = vpop.f32.mrf.mxu0
        %v943 = vadd.f32 %v744, %v942
        %v944 = vpop.f32.mrf.mxu0
        %v945 = vadd.f32 %v744, %v944
        %946 = vmatmul.bf16.gmra.mxu0 %v706
        %v947 = vpop.f32.mrf.mxu0
        %v948 = vadd.f32 %v744, %v947
        %v949 = vpop.f32.mrf.mxu0
        %v950 = vadd.f32 %v744, %v949
        %951 = vmatmul.bf16.gmra.mxu0 %v707
        %v952 = vpop.f32.mrf.mxu0
        %v953 = vadd.f32 %v744, %v952
        %v954 = vpop.f32.mrf.mxu0
        %v955 = vadd.f32 %v744, %v954
        %956 = vmatmul.bf16.gmra.mxu0 %v708
        %v957 = vpop.f32.mrf.mxu0
        %v958 = vadd.f32 %v744, %v957
        %v959 = vpop.f32.mrf.mxu0
        %v960 = vadd.f32 %v744, %v959
        %961 = vmatmul.bf16.gmra.mxu0 %v709
        %v962 = vpop.f32.mrf.mxu0
        %v963 = vadd.f32 %v744, %v962
        %v964 = vpop.f32.mrf.mxu0
        %v965 = vadd.f32 %v744, %v964
        %966 = vdwg.mxu0
        %967 = vmatpush.bf16.msra.mxu0 %v852
        %968 = vmatpush.bf16.msra.mxu0 %v849
        %969 = vmatpush.bf16.msra.mxu0 %v846
        %970 = vmatpush.bf16.msra.mxu0 %v843
        %971 = vmatpush.bf16.msra.mxu0 %v840
        %972 = vmatpush.bf16.msra.mxu0 %v837
        %973 = vmatpush.bf16.msra.mxu0 %v834
        %974 = vmatpush.bf16.msra.mxu0 %v831
        %975 = vmatmul.bf16.gmra.mxu0 %v694
        %v976 = vpop.f32.mrf.mxu0
        %v977 = vadd.f32 %v745, %v976
        %v978 = vpop.f32.mrf.mxu0
        %v979 = vadd.f32 %v745, %v978
        %980 = vmatmul.bf16.gmra.mxu0 %v695
        %v981 = vpop.f32.mrf.mxu0
        %v982 = vadd.f32 %v745, %v981
        %v983 = vpop.f32.mrf.mxu0
        %v984 = vadd.f32 %v745, %v983
        %985 = vmatmul.bf16.gmra.mxu0 %v696
        %v986 = vpop.f32.mrf.mxu0
        %v987 = vadd.f32 %v745, %v986
        %v988 = vpop.f32.mrf.mxu0
        %v989 = vadd.f32 %v745, %v988
        %990 = vmatmul.bf16.gmra.mxu0 %v697
        %v991 = vpop.f32.mrf.mxu0
        %v992 = vadd.f32 %v745, %v991
        %v993 = vpop.f32.mrf.mxu0
        %v994 = vadd.f32 %v745, %v993
        %995 = vmatmul.bf16.gmra.mxu0 %v698
        %v996 = vpop.f32.mrf.mxu0
        %v997 = vadd.f32 %v745, %v996
        %v998 = vpop.f32.mrf.mxu0
        %v999 = vadd.f32 %v745, %v998
        %1000 = vmatmul.bf16.gmra.mxu0 %v699
        %v1001 = vpop.f32.mrf.mxu0
        %v1002 = vadd.f32 %v745, %v1001
        %v1003 = vpop.f32.mrf.mxu0
        %v1004 = vadd.f32 %v745, %v1003
        %1005 = vmatmul.bf16.gmra.mxu0 %v700
        %v1006 = vpop.f32.mrf.mxu0
        %v1007 = vadd.f32 %v745, %v1006
        %v1008 = vpop.f32.mrf.mxu0
        %v1009 = vadd.f32 %v745, %v1008
        %1010 = vmatmul.bf16.gmra.mxu0 %v701
        %v1011 = vpop.f32.mrf.mxu0
        %v1012 = vadd.f32 %v745, %v1011
        %v1013 = vpop.f32.mrf.mxu0
        %v1014 = vadd.f32 %v745, %v1013
        %1015 = vmatmul.bf16.gmra.mxu0 %v702
        %v1016 = vpop.f32.mrf.mxu0
        %v1017 = vadd.f32 %v745, %v1016
        %v1018 = vpop.f32.mrf.mxu0
        %v1019 = vadd.f32 %v745, %v1018
        %1020 = vmatmul.bf16.gmra.mxu0 %v703
        %v1021 = vpop.f32.mrf.mxu0
        %v1022 = vadd.f32 %v745, %v1021
        %v1023 = vpop.f32.mrf.mxu0
        %v1024 = vadd.f32 %v745, %v1023
        %1025 = vmatmul.bf16.gmra.mxu0 %v704
        %v1026 = vpop.f32.mrf.mxu0
        %v1027 = vadd.f32 %v745, %v1026
        %v1028 = vpop.f32.mrf.mxu0
        %v1029 = vadd.f32 %v745, %v1028
        %1030 = vmatmul.bf16.gmra.mxu0 %v705
        %v1031 = vpop.f32.mrf.mxu0
        %v1032 = vadd.f32 %v745, %v1031
        %v1033 = vpop.f32.mrf.mxu0
        %v1034 = vadd.f32 %v745, %v1033
        %1035 = vmatmul.bf16.gmra.mxu0 %v706
        %v1036 = vpop.f32.mrf.mxu0
        %v1037 = vadd.f32 %v745, %v1036
        %v1038 = vpop.f32.mrf.mxu0
        %v1039 = vadd.f32 %v745, %v1038
        %1040 = vmatmul.bf16.gmra.mxu0 %v707
        %v1041 = vpop.f32.mrf.mxu0
        %v1042 = vadd.f32 %v745, %v1041
        %v1043 = vpop.f32.mrf.mxu0
        %v1044 = vadd.f32 %v745, %v1043
        %1045 = vmatmul.bf16.gmra.mxu0 %v708
        %v1046 = vpop.f32.mrf.mxu0
        %v1047 = vadd.f32 %v745, %v1046
        %v1048 = vpop.f32.mrf.mxu0
        %v1049 = vadd.f32 %v745, %v1048
        %1050 = vmatmul.bf16.gmra.mxu0 %v709
        %v1051 = vpop.f32.mrf.mxu0
        %v1052 = vadd.f32 %v745, %v1051
        %v1053 = vpop.f32.mrf.mxu0
        %v1054 = vadd.f32 %v745, %v1053
        %1055 = vdwg.mxu0
        %1056 = vmatpush.bf16.msra.mxu0 %v853
        %1057 = vmatpush.bf16.msra.mxu0 %v850
        %1058 = vmatpush.bf16.msra.mxu0 %v847
        %1059 = vmatpush.bf16.msra.mxu0 %v844
        %1060 = vmatpush.bf16.msra.mxu0 %v841
        %1061 = vmatpush.bf16.msra.mxu0 %v838
        %1062 = vmatpush.bf16.msra.mxu0 %v835
        %1063 = vmatpush.bf16.msra.mxu0 %v832
        %1064 = vmatmul.bf16.gmra.mxu0 %v694
        %v1065 = vpop.f32.mrf.mxu0
        %v1066 = vadd.f32 %v746, %v1065
        %v1067 = vpop.f32.mrf.mxu0
        %v1068 = vadd.f32 %v746, %v1067
        %1069 = vmatmul.bf16.gmra.mxu0 %v695
        %v1070 = vpop.f32.mrf.mxu0
        %v1071 = vadd.f32 %v746, %v1070
        %v1072 = vpop.f32.mrf.mxu0
        %v1073 = vadd.f32 %v746, %v1072
        %1074 = vmatmul.bf16.gmra.mxu0 %v696
        %v1075 = vpop.f32.mrf.mxu0
        %v1076 = vadd.f32 %v746, %v1075
        %v1077 = vpop.f32.mrf.mxu0
        %v1078 = vadd.f32 %v746, %v1077
        %1079 = vmatmul.bf16.gmra.mxu0 %v697
        %v1080 = vpop.f32.mrf.mxu0
        %v1081 = vadd.f32 %v746, %v1080
        %v1082 = vpop.f32.mrf.mxu0
        %v1083 = vadd.f32 %v746, %v1082
        %1084 = vmatmul.bf16.gmra.mxu0 %v698
        %v1085 = vpop.f32.mrf.mxu0
        %v1086 = vadd.f32 %v746, %v1085
        %v1087 = vpop.f32.mrf.mxu0
        %v1088 = vadd.f32 %v746, %v1087
        %1089 = vmatmul.bf16.gmra.mxu0 %v699
        %v1090 = vpop.f32.mrf.mxu0
        %v1091 = vadd.f32 %v746, %v1090
        %v1092 = vpop.f32.mrf.mxu0
        %v1093 = vadd.f32 %v746, %v1092
        %1094 = vmatmul.bf16.gmra.mxu0 %v700
        %v1095 = vpop.f32.mrf.mxu0
        %v1096 = vadd.f32 %v746, %v1095
        %v1097 = vpop.f32.mrf.mxu0
        %v1098 = vadd.f32 %v746, %v1097
        %1099 = vmatmul.bf16.gmra.mxu0 %v701
        %v1100 = vpop.f32.mrf.mxu0
        %v1101 = vadd.f32 %v746, %v1100
        %v1102 = vpop.f32.mrf.mxu0
        %v1103 = vadd.f32 %v746, %v1102
        %1104 = vmatmul.bf16.gmra.mxu0 %v702
        %v1105 = vpop.f32.mrf.mxu0
        %v1106 = vadd.f32 %v746, %v1105
        %v1107 = vpop.f32.mrf.mxu0
        %v1108 = vadd.f32 %v746, %v1107
        %1109 = vmatmul.bf16.gmra.mxu0 %v703
        %v1110 = vpop.f32.mrf.mxu0
        %v1111 = vadd.f32 %v746, %v1110
        %v1112 = vpop.f32.mrf.mxu0
        %v1113 = vadd.f32 %v746, %v1112
        %1114 = vmatmul.bf16.gmra.mxu0 %v704
        %v1115 = vpop.f32.mrf.mxu0
        %v1116 = vadd.f32 %v746, %v1115
        %v1117 = vpop.f32.mrf.mxu0
        %v1118 = vadd.f32 %v746, %v1117
        %1119 = vmatmul.bf16.gmra.mxu0 %v705
        %v1120 = vpop.f32.mrf.mxu0
        %v1121 = vadd.f32 %v746, %v1120
        %v1122 = vpop.f32.mrf.mxu0
        %v1123 = vadd.f32 %v746, %v1122
        %1124 = vmatmul.bf16.gmra.mxu0 %v706
        %v1125 = vpop.f32.mrf.mxu0
        %v1126 = vadd.f32 %v746, %v1125
        %v1127 = vpop.f32.mrf.mxu0
        %v1128 = vadd.f32 %v746, %v1127
        %1129 = vmatmul.bf16.gmra.mxu0 %v707
        %v1130 = vpop.f32.mrf.mxu0
        %v1131 = vadd.f32 %v746, %v1130
        %v1132 = vpop.f32.mrf.mxu0
        %v1133 = vadd.f32 %v746, %v1132
        %1134 = vmatmul.bf16.gmra.mxu0 %v708
        %v1135 = vpop.f32.mrf.mxu0
        %v1136 = vadd.f32 %v746, %v1135
        %v1137 = vpop.f32.mrf.mxu0
        %v1138 = vadd.f32 %v746, %v1137
        %1139 = vmatmul.bf16.gmra.mxu0 %v709
        %v1140 = vpop.f32.mrf.mxu0
        %v1141 = vadd.f32 %v746, %v1140
        %v1142 = vpop.f32.mrf.mxu0
        %v1143 = vadd.f32 %v746, %v1142
        %1144 = vdwg.mxu0
        %v1145 = vpack.c.bf16 %v977, %v888
        %v1146 = vpack.c.bf16 %v1066, %v1066
        %v1147 = vpack.c.bf16 %v979, %v890
        %v1148 = vpack.c.bf16 %v1068, %v1068
        %v1149 = vpack.c.bf16 %v982, %v893
        %v1150 = vpack.c.bf16 %v1071, %v1071
        %v1151 = vpack.c.bf16 %v984, %v895
        %v1152 = vpack.c.bf16 %v1073, %v1073
        %v1153 = vpack.c.bf16 %v987, %v898
        %v1154 = vpack.c.bf16 %v1076, %v1076
        %v1155 = vpack.c.bf16 %v989, %v900
        %v1156 = vpack.c.bf16 %v1078, %v1078
        %v1157 = vpack.c.bf16 %v992, %v903
        %v1158 = vpack.c.bf16 %v1081, %v1081
        %v1159 = vpack.c.bf16 %v994, %v905
        %v1160 = vpack.c.bf16 %v1083, %v1083
        %v1161 = vpack.c.bf16 %v997, %v908
        %v1162 = vpack.c.bf16 %v1086, %v1086
        %v1163 = vpack.c.bf16 %v999, %v910
        %v1164 = vpack.c.bf16 %v1088, %v1088
        %v1165 = vpack.c.bf16 %v1002, %v913
        %v1166 = vpack.c.bf16 %v1091, %v1091
        %v1167 = vpack.c.bf16 %v1004, %v915
        %v1168 = vpack.c.bf16 %v1093, %v1093
        %v1169 = vpack.c.bf16 %v1007, %v918
        %v1170 = vpack.c.bf16 %v1096, %v1096
        %v1171 = vpack.c.bf16 %v1009, %v920
        %v1172 = vpack.c.bf16 %v1098, %v1098
        %v1173 = vpack.c.bf16 %v1012, %v923
        %v1174 = vpack.c.bf16 %v1101, %v1101
        %v1175 = vpack.c.bf16 %v1014, %v925
        %v1176 = vpack.c.bf16 %v1103, %v1103
        %v1177 = vpack.c.bf16 %v1017, %v928
        %v1178 = vpack.c.bf16 %v1106, %v1106
        %v1179 = vpack.c.bf16 %v1019, %v930
        %v1180 = vpack.c.bf16 %v1108, %v1108
        %v1181 = vpack.c.bf16 %v1022, %v933
        %v1182 = vpack.c.bf16 %v1111, %v1111
        %v1183 = vpack.c.bf16 %v1024, %v935
        %v1184 = vpack.c.bf16 %v1113, %v1113
        %v1185 = vpack.c.bf16 %v1027, %v938
        %v1186 = vpack.c.bf16 %v1116, %v1116
        %v1187 = vpack.c.bf16 %v1029, %v940
        %v1188 = vpack.c.bf16 %v1118, %v1118
        %v1189 = vpack.c.bf16 %v1032, %v943
        %v1190 = vpack.c.bf16 %v1121, %v1121
        %v1191 = vpack.c.bf16 %v1034, %v945
        %v1192 = vpack.c.bf16 %v1123, %v1123
        %v1193 = vpack.c.bf16 %v1037, %v948
        %v1194 = vpack.c.bf16 %v1126, %v1126
        %v1195 = vpack.c.bf16 %v1039, %v950
        %v1196 = vpack.c.bf16 %v1128, %v1128
        %v1197 = vpack.c.bf16 %v1042, %v953
        %v1198 = vpack.c.bf16 %v1131, %v1131
        %v1199 = vpack.c.bf16 %v1044, %v955
        %v1200 = vpack.c.bf16 %v1133, %v1133
        %v1201 = vpack.c.bf16 %v1047, %v958
        %v1202 = vpack.c.bf16 %v1136, %v1136
        %v1203 = vpack.c.bf16 %v1049, %v960
        %v1204 = vpack.c.bf16 %v1138, %v1138
        %v1205 = vpack.c.bf16 %v1052, %v963
        %v1206 = vpack.c.bf16 %v1141, %v1141
        %v1207 = vpack.c.bf16 %v1054, %v965
        %v1208 = vpack.c.bf16 %v1143, %v1143
        %1209 = vst [vmem:[%s288] sm:$0xff] %v1145
        %1210 = vst [vmem:[%s288 + $0x8] sm:$0xf] %v1146
        %1211 = vst [vmem:[%s288 + $0xc] sm:$0xff] %v1147
        %1212 = vst [vmem:[%s288 + $0x14] sm:$0xf] %v1148
        %1213 = vst [vmem:[%s288 + $0x18] sm:$0xff] %v1149
        %1214 = vst [vmem:[%s288 + $0x20] sm:$0xf] %v1150
        %1215 = vst [vmem:[%s288 + $0x24] sm:$0xff] %v1151
        %1216 = vst [vmem:[%s288 + $0x2c] sm:$0xf] %v1152
        %1217 = vst [vmem:[%s288 + $0x30] sm:$0xff] %v1153
        %1218 = vst [vmem:[%s288 + $0x38] sm:$0xf] %v1154
        %1219 = vst [vmem:[%s288 + $0x3c] sm:$0xff] %v1155
        %1220 = vst [vmem:[%s288 + $0x44] sm:$0xf] %v1156
        %1221 = vst [vmem:[%s288 + $0x48] sm:$0xff] %v1157
        %1222 = vst [vmem:[%s288 + $0x50] sm:$0xf] %v1158
        %1223 = vst [vmem:[%s288 + $0x54] sm:$0xff] %v1159
        %1224 = vst [vmem:[%s288 + $0x5c] sm:$0xf] %v1160
        %1225 = vst [vmem:[%s288 + $0x60] sm:$0xff] %v1161
        %1226 = vst [vmem:[%s288 + $0x68] sm:$0xf] %v1162
        %1227 = vst [vmem:[%s288 + $0x6c] sm:$0xff] %v1163
        %1228 = vst [vmem:[%s288 + $0x74] sm:$0xf] %v1164
        %1229 = vst [vmem:[%s288 + $0x78] sm:$0xff] %v1165
        %1230 = vst [vmem:[%s288 + $0x80] sm:$0xf] %v1166
        %1231 = vst [vmem:[%s288 + $0x84] sm:$0xff] %v1167
        %1232 = vst [vmem:[%s288 + $0x8c] sm:$0xf] %v1168
        %1233 = vst [vmem:[%s288 + $0x90] sm:$0xff] %v1169
        %1234 = vst [vmem:[%s288 + $0x98] sm:$0xf] %v1170
        %1235 = vst [vmem:[%s288 + $0x9c] sm:$0xff] %v1171
        %1236 = vst [vmem:[%s288 + $0xa4] sm:$0xf] %v1172
        %1237 = vst [vmem:[%s288 + $0xa8] sm:$0xff] %v1173
        %1238 = vst [vmem:[%s288 + $0xb0] sm:$0xf] %v1174
        %1239 = vst [vmem:[%s288 + $0xb4] sm:$0xff] %v1175
        %1240 = vst [vmem:[%s288 + $0xbc] sm:$0xf] %v1176
        %1241 = vst [vmem:[%s288 + $0xc0] sm:$0xff] %v1177
        %1242 = vst [vmem:[%s288 + $0xc8] sm:$0xf] %v1178
        %1243 = vst [vmem:[%s288 + $0xcc] sm:$0xff] %v1179
        %1244 = vst [vmem:[%s288 + $0xd4] sm:$0xf] %v1180
        %1245 = vst [vmem:[%s288 + $0xd8] sm:$0xff] %v1181
        %1246 = vst [vmem:[%s288 + $0xe0] sm:$0xf] %v1182
        %1247 = vst [vmem:[%s288 + $0xe4] sm:$0xff] %v1183
        %1248 = vst [vmem:[%s288 + $0xec] sm:$0xf] %v1184
        %1249 = vst [vmem:[%s288 + $0xf0] sm:$0xff] %v1185
        %1250 = vst [vmem:[%s288 + $0xf8] sm:$0xf] %v1186
        %1251 = vst [vmem:[%s288 + $0xfc] sm:$0xff] %v1187
        %1252 = vst [vmem:[%s288 + $0x104] sm:$0xf] %v1188
        %1253 = vst [vmem:[%s288 + $0x108] sm:$0xff] %v1189
        %1254 = vst [vmem:[%s288 + $0x110] sm:$0xf] %v1190
        %1255 = vst [vmem:[%s288 + $0x114] sm:$0xff] %v1191
        %1256 = vst [vmem:[%s288 + $0x11c] sm:$0xf] %v1192
        %1257 = vst [vmem:[%s288 + $0x120] sm:$0xff] %v1193
        %1258 = vst [vmem:[%s288 + $0x128] sm:$0xf] %v1194
        %1259 = vst [vmem:[%s288 + $0x12c] sm:$0xff] %v1195
        %1260 = vst [vmem:[%s288 + $0x134] sm:$0xf] %v1196
        %1261 = vst [vmem:[%s288 + $0x138] sm:$0xff] %v1197
        %1262 = vst [vmem:[%s288 + $0x140] sm:$0xf] %v1198
        %1263 = vst [vmem:[%s288 + $0x144] sm:$0xff] %v1199
        %1264 = vst [vmem:[%s288 + $0x14c] sm:$0xf] %v1200
        %1265 = vst [vmem:[%s288 + $0x150] sm:$0xff] %v1201
        %1266 = vst [vmem:[%s288 + $0x158] sm:$0xf] %v1202
        %1267 = vst [vmem:[%s288 + $0x15c] sm:$0xff] %v1203
        %1268 = vst [vmem:[%s288 + $0x164] sm:$0xf] %v1204
        %1269 = vst [vmem:[%s288 + $0x168] sm:$0xff] %v1205
        %1270 = vst [vmem:[%s288 + $0x170] sm:$0xf] %v1206
        %1271 = vst [vmem:[%s288 + $0x174] sm:$0xff] %v1207
        %1272 = vst [vmem:[%s288 + $0x17c] sm:$0xf] %v1208
        %s1273 = sand.u32 %s163, 1
        %s1274 = scalar_lea.sflag [#allocation4], %s1273
        %s1275 = sand.u32 %s163, 1
        %s1276 = smul.addr %s1275, 384
        %s1277 = scalar_lea.vmem [#allocation7], %s1276
        // Predicated region
        $region53: #{tpu_custom_call.1} parent=43 // pred_check
          %p1278 = pneg %p173
        $region54: #{tpu_custom_call.1} parent=43 // pred_check_branch
          %1280 = sbr.rel (%p1278) target = $region56
        $region55: #{tpu_custom_call.1} parent=43 // pred_region
          %1282 = vsyncadd %s1274, 0
          %s1283 = smul.addr %s24, 96
          %s1284 = smul.addr %s1283, 4
          %s1285 = scalar_lea.hbm %s6, %s1284
          %s1286 = sshll.u32 %s1277, 4
          %s1287 = int_to_ptr.vmem [resolvable:$true] %s1286
          %s1288 = sshll.u32 %s1285, 4
          %s1289 = int_to_ptr.hbm [resolvable:$true] %s1288
          %1294 = dma.vmem_to_hbm [thread:$0]  %s1287, 6144, %s1289, %s1274, 192, 192, 12
        $region56: #{tpu_custom_call.1} parent=43 // pred_fallthru
          _
      $region44: #{tpu_custom_call.1} parent=5 // pred_fallthru
        _
      %p1295 = scmp.le.s32.totalorder 2, %s19
      // Predicated region
      $region57: #{tpu_custom_call.1} parent=5 // pred_check
        %p1296 = pneg %p1295
      $region58: #{tpu_custom_call.1} parent=5 // pred_check_branch
        %1298 = sbr.rel (%p1296) target = $region60
      $region59: #{tpu_custom_call.1} parent=5 // pred_region
        %s1299 = ssub.s32 %s19, 2
        // Predicated region
        $region61: #{tpu_custom_call.1} parent=59 // pred_check
          %p1300 = pneg %p179
        $region62: #{tpu_custom_call.1} parent=59 // pred_check_branch
          %1302 = sbr.rel (%p1300) target = $region64
        $region63: #{tpu_custom_call.1} parent=59 // pred_region
          %s1303 = sand.u32 %s164, 1
          %s1304 = scalar_lea.sflag [#allocation4], %s1303
          %s1305 = sand.u32 %s164, 1
          %s1306 = smul.addr %s1305, 384
          %s1307 = scalar_lea.vmem [#allocation7], %s1306
          %1309 = dma.done %s1304, 6144
        $region64: #{tpu_custom_call.1} parent=59 // pred_fallthru
          _
      $region60: #{tpu_custom_call.1} parent=5 // pred_fallthru
        _
    $region6: #{tpu_custom_call.1} parent=1 // loop_footer
      %s23 = sadd.s32 1, %s19
    $region7: #{tpu_custom_call.1} parent=1 // loop_footer_branch
      %18 = sbr.rel target = $region3
    $region8: #{tpu_custom_call.1} parent=1 // loop_exit
      _
    %1310 = vsyncpa [#allocation3], 1
    %s1311 = scalar_lea.sflag [#allocation3], 1
    %1312 = vsyncpa %s1311, 1
    %1313 = vsyncpa [#allocation6], 1
    %1314 = vsyncpa [#allocation4], 1
    %s1315 = scalar_lea.sflag [#allocation4], 1
    %1316 = vsyncpa %s1315, 1

</llo_original>
